<compile_context>
chip_gen: v5e
topology: v5e:2x2
jax: 0.10.0
libtpu: 0.0.40
codegen_flags: <defaults>
</compile_context>

<pallas_src>
import math

import jax
import jax.numpy as jnp
import numpy as np
from jax.experimental import pallas as pl
from jax.experimental.pallas import tpu as pltpu

LANE = 128      # lane width of the packed activation slab
TM_MAX = 1024   # max packed rows per grid step (1024 rows * 4 samples/row = 4096 samples)


def _round_up(x, m):
    return ((x + m - 1) // m) * m


def _packing(layers):
    """Choose (groups G, per-group width H, slab lane width)."""
    hidden = layers[1:-1]
    assert len(hidden) >= 1, "GrossPitaevskiiPINN kernel expects at least one hidden layer"
    H = max(hidden)
    if H >= LANE:
        slab = _round_up(H, LANE)
        return 1, slab, slab
    G = LANE // H
    return G, H, LANE


def init_params(layers, key):
    """PyTorch nn.Linear default init: U(-1/sqrt(fan_in), 1/sqrt(fan_in)) for W and b."""
    params = []
    for i in range(len(layers) - 1):
        fan_in, fan_out = layers[i], layers[i + 1]
        k = 1.0 / math.sqrt(fan_in)
        key, kw, kb = jax.random.split(key, 3)
        w = jax.random.uniform(kw, (fan_in, fan_out), jnp.float32, -k, k)
        b = jax.random.uniform(kb, (fan_out,), jnp.float32, -k, k)
        params.append((w, b))
    return params


def _pack_params(params, G, H, slab, mxu_dtype):
    """Pack L Linear layers into 5 block-structured operands.

    Returns:
      w_first  (G*d_in, slab)       f32        first layer, block per sample-group
      w_hidden (max(L-2,1), slab, slab) mxu    block-diagonal hidden weights (layers 1..L-2)
      b_slab   (L-1, 1, slab)       f32        biases of layers 0..L-2, tiled per group
      w_last   (slab, G*d_out)      mxu        last layer, block-column per group
      b_last   (1, G*d_out)         f32
    """
    num_linear = len(params)
    d_in = params[0][0].shape[0]
    d_out = params[-1][0].shape[1]

    w0 = np.asarray(params[0][0], np.float32)
    w_first = np.zeros((G * d_in, slab), np.float32)
    for g in range(G):
        w_first[g * d_in:(g + 1) * d_in, g * H:g * H + w0.shape[1]] = w0

    n_hid_store = max(num_linear - 2, 1)
    w_hidden = np.zeros((n_hid_store, slab, slab), np.float32)
    for li in range(1, num_linear - 1):
        w = np.asarray(params[li][0], np.float32)
        for g in range(G):
            w_hidden[li - 1, g * H:g * H + w.shape[0], g * H:g * H + w.shape[1]] = w

    b_slab = np.zeros((num_linear - 1, 1, slab), np.float32)
    for li in range(num_linear - 1):
        b = np.asarray(params[li][1], np.float32)
        for g in range(G):
            b_slab[li, 0, g * H:g * H + b.shape[0]] = b

    wl = np.asarray(params[-1][0], np.float32)
    w_last = np.zeros((slab, G * d_out), np.float32)
    for g in range(G):
        w_last[g * H:g * H + wl.shape[0], g * d_out:(g + 1) * d_out] = wl

    bl = np.asarray(params[-1][1], np.float32)
    b_last = np.tile(bl[None, :], (1, G)).astype(np.float32)   # (1, G*d_out)

    return (jnp.asarray(w_first, jnp.float32),
            jnp.asarray(w_hidden, mxu_dtype),
            jnp.asarray(b_slab, jnp.float32),
            jnp.asarray(w_last, mxu_dtype),
            jnp.asarray(b_last, jnp.float32))


def _make_kernel(num_linear, first_k, mxu_dtype):
    """Pallas kernel: Linear -> Tanh -> ... -> Linear on the packed lane slab."""
    n_hid = num_linear - 2

    def kernel(x_ref, w1_ref, wh_ref, bs_ref, wl_ref, bl_ref, o_ref):
        x = x_ref[...]                                   # (TM, G*d_in)  f32, true packed width

        # ---- first layer (f32: v5e VPU/EUP have no bf16 path) ----
        if first_k == 1:
            # K=1: pure VPU outer product, skips a >99%-zero-K MXU pass.
            h = x[:, 0:1] * w1_ref[0:1, :] + bs_ref[0]
        else:
            h = jnp.dot(x, w1_ref[...], preferred_element_type=jnp.float32) + bs_ref[0]
        h = jnp.tanh(h)                                  # (TM, slab)

        # ---- hidden layers: block-diagonal MXU matmuls, f32 accumulation ----
        for li in range(n_hid):
            w = wh_ref[li]                               # (slab, slab) in mxu_dtype
            h = jnp.dot(h.astype(mxu_dtype), w, preferred_element_type=jnp.float32)
            h = jnp.tanh(h + bs_ref[li + 1])

        # ---- last layer: block-column weight -> (TM, G*d_out), no activation ----
        o = jnp.dot(h.astype(mxu_dtype), wl_ref[...], preferred_element_type=jnp.float32)
        o_ref[...] = (o + bl_ref[...]).astype(o_ref.dtype)

    return kernel


def gpe_pinn_forward(x, params, *, mxu_dtype=jnp.float32):
    """Forward pass of GrossPitaevskiiPINN (tanh MLP) as a single Pallas TPU kernel.

    x: (N, d_in) float32.  Returns (N, d_out) float32.
    mxu_dtype: jnp.float32 (exact) or jnp.bfloat16 (fast MXU path on v6e/v7x; f32 accumulation).
    """
    x = jnp.asarray(x, jnp.float32)
    n, d_in = x.shape
    num_linear = len(params)
    assert num_linear >= 2, "expect at least one hidden layer"
    d_out = params[-1][0].shape[1]
    layers = [d_in] + [w.shape[1] for w, _ in params]
    G, H, slab = _packing(layers)

    w_first, w_hidden, b_slab, w_last, b_last = _pack_params(params, G, H, slab, mxu_dtype)

    # Pack G samples per row; pad rows to a multiple of the batch tile (single jnp.pad).
    n_rows = pl.cdiv(n, G)
    tm = min(TM_MAX, _round_up(pl.cdiv(n_rows, 2), 8))   # grid >= 2 when possible (v7x: 2 TCs)
    n_rows_pad = _round_up(n_rows, tm)
    n_pad = n_rows_pad * G
    x_packed = jnp.pad(x, ((0, n_pad - n), (0, 0))).reshape(n_rows_pad, G * d_in)

    grid = (n_rows_pad // tm,)
    n_hid_store = w_hidden.shape[0]
    nb = b_slab.shape[0]

    out_packed = pl.pallas_call(
        _make_kernel(num_linear, G * d_in, mxu_dtype),
        out_shape=jax.ShapeDtypeStruct((n_rows_pad, G * d_out), jnp.float32),
        grid_spec=pltpu.PrefetchScalarGridSpec(
            num_scalar_prefetch=0,
            grid=grid,
            in_specs=[
                pl.BlockSpec((tm, G * d_in), lambda i: (i, 0)),              # packed input rows
                pl.BlockSpec((G * d_in, slab), lambda i: (0, 0)),            # first-layer block weight
                pl.BlockSpec((n_hid_store, slab, slab), lambda i: (0, 0, 0)),  # block-diag hidden weights
                pl.BlockSpec((nb, 1, slab), lambda i: (0, 0, 0)),            # tiled biases (layers 0..L-2)
                pl.BlockSpec((slab, G * d_out), lambda i: (0, 0)),           # last-layer block-column weight
                pl.BlockSpec((1, G * d_out), lambda i: (0, 0)),              # last bias
            ],
            out_specs=pl.BlockSpec((tm, G * d_out), lambda i: (i, 0)),       # packed output rows
        ),
        compiler_params=pltpu.CompilerParams(
            dimension_semantics=("parallel",),    # batch tiles independent (megacore-splittable)
        ),
    )(x_packed, w_first, w_hidden, b_slab, w_last, b_last)

    # Unpack: row r / group g  <->  sample r*G + g  (plain row-major reshape).
    return out_packed.reshape(n_pad, d_out)[:n]


def gpe_pinn_forward_ref(x, params):
    """Pure-JAX reference of the same MLP."""
    h = x
    for li, (w, b) in enumerate(params):
        h = h @ w + b
        if li < len(params) - 1:
            h = jnp.tanh(h)
    return h


if __name__ == "__main__":
    # layers=[1, 32, 32, 32, 1]: 1D collocation points -> scalar perturbation.
    layers = [1, 32, 32, 32, 1]
    key = jax.random.PRNGKey(0)
    key, kx1, kx2 = jax.random.split(key, 3)
    params = init_params(layers, key)

    # Small batch: single tile, exact G-multiple.
    x1 = jax.random.uniform(kx1, (8, 1), jnp.float32, 0.0, 30.0)      # points in the [0, 30] box
    out1 = jax.block_until_ready(gpe_pinn_forward(x1, params))
    ref1 = gpe_pinn_forward_ref(x1, params)
    np.testing.assert_allclose(np.asarray(out1), np.asarray(ref1), rtol=1e-5, atol=1e-5)

    # Larger batch: 1000 samples -> 250 packed rows -> tm=128, grid=2 (both v7x TCs busy),
    # exercises G-padding and row-tile tail padding.
    x2 = jax.random.uniform(kx2, (1000, 1), jnp.float32, 0.0, 30.0)
    out2 = jax.block_until_ready(gpe_pinn_forward(x2, params))
    ref2 = gpe_pinn_forward_ref(x2, params)
    np.testing.assert_allclose(np.asarray(out2), np.asarray(ref2), rtol=1e-5, atol=1e-5)

    # bf16 MXU-operand fast path (v6e/v7x native; f32 accumulation kept) -- looser tolerance
    # against the f32 reference, as flagged in the review.
    out3 = jax.block_until_ready(gpe_pinn_forward(x2, params, mxu_dtype=jnp.bfloat16))
    np.testing.assert_allclose(np.asarray(out3), np.asarray(ref2), rtol=1e-1, atol=1e-1)

    # TODO(synk): pde_loss/boundary_loss need gradients through the network (torch.autograd);
    # pallas_call has no automatic VJP, so PINN training requires a custom_vjp with a
    # hand-written backward kernel reusing the same packed weight operands — not implemented here.
    print("KERNEL_OK")
</pallas_src>

<mosaic_0001>
module attributes {stable_mosaic.version = 11 : i64} {
  func.func @kernel(%arg0: i32, %arg1: memref<8x4xf32, #tpu.memory_space<vmem>>, %arg2: memref<4x128xf32, #tpu.memory_space<vmem>>, %arg3: memref<2x128x128xf32, #tpu.memory_space<vmem>>, %arg4: memref<3x1x128xf32, #tpu.memory_space<vmem>>, %arg5: memref<128x4xf32, #tpu.memory_space<vmem>>, %arg6: memref<1x4xf32, #tpu.memory_space<vmem>>, %arg7: memref<8x4xf32, #tpu.memory_space<vmem>>) attributes {dimension_semantics = [#tpu.dimension_semantics<parallel>], iteration_bounds = array<i64: 1>, scalar_prefetch = 0 : i64, scratch_operands = 0 : i64, tpu.core_type = #tpu.core_type<tc>, window_params = [{transform_indices = @transform_0, window_bounds = array<i64: 8, 4>}, {pipeline_mode = #tpu.pipeline_mode<synchronous>, transform_indices = @transform_1, window_bounds = array<i64: 4, 128>}, {pipeline_mode = #tpu.pipeline_mode<synchronous>, transform_indices = @transform_2, window_bounds = array<i64: 2, 128, 128>}, {pipeline_mode = #tpu.pipeline_mode<synchronous>, transform_indices = @transform_3, window_bounds = array<i64: 3, 1, 128>}, {pipeline_mode = #tpu.pipeline_mode<synchronous>, transform_indices = @transform_4, window_bounds = array<i64: 128, 4>}, {pipeline_mode = #tpu.pipeline_mode<synchronous>, transform_indices = @transform_5, window_bounds = array<i64: 1, 4>}, {transform_indices = @transform_6, window_bounds = array<i64: 8, 4>}]} {
    %c0 = arith.constant 0 : index
    %c0_0 = arith.constant 0 : index
    %0 = vector.load %arg1[%c0, %c0_0] : memref<8x4xf32, #tpu.memory_space<vmem>>, vector<8x4xf32>
    %c0_1 = arith.constant 0 : index
    %c0_2 = arith.constant 0 : index
    %1 = vector.load %arg2[%c0_1, %c0_2] : memref<4x128xf32, #tpu.memory_space<vmem>>, vector<4x128xf32>
    %cst = arith.constant dense<0.000000e+00> : vector<8x128xf32>
    %2 = tpu.matmul %0, %1, %cst {dimension_numbers = #tpu.dot_dimension_numbers<[1], [0], [0], [1], [0, 0, 1, 1], [], []>} : vector<8x4xf32>, vector<4x128xf32>, vector<8x128xf32> -> vector<8x128xf32>
    %c0_3 = arith.constant 0 : index
    %c0_4 = arith.constant 0 : index
    %c0_5 = arith.constant 0 : index
    %3 = vector.load %arg4[%c0_3, %c0_4, %c0_5] : memref<3x1x128xf32, #tpu.memory_space<vmem>>, vector<1x1x128xf32>
    %4 = vector.shape_cast %3 : vector<1x1x128xf32> to vector<1x128xf32>
    %5 = vector.broadcast %4 : vector<1x128xf32> to vector<8x128xf32>
    %6 = arith.addf %2, %5 : vector<8x128xf32>
    %7 = math.tanh %6 : vector<8x128xf32>
    %c0_6 = arith.constant 0 : index
    %c0_7 = arith.constant 0 : index
    %c0_8 = arith.constant 0 : index
    %8 = vector.load %arg3[%c0_6, %c0_7, %c0_8] : memref<2x128x128xf32, #tpu.memory_space<vmem>>, vector<1x128x128xf32>
    %9 = vector.shape_cast %8 : vector<1x128x128xf32> to vector<128x128xf32>
    %cst_9 = arith.constant dense<0.000000e+00> : vector<8x128xf32>
    %10 = tpu.matmul %7, %9, %cst_9 {dimension_numbers = #tpu.dot_dimension_numbers<[1], [0], [0], [1], [0, 0, 1, 1], [], []>} : vector<8x128xf32>, vector<128x128xf32>, vector<8x128xf32> -> vector<8x128xf32>
    %c1 = arith.constant 1 : index
    %c0_10 = arith.constant 0 : index
    %c0_11 = arith.constant 0 : index
    %11 = vector.load %arg4[%c1, %c0_10, %c0_11] : memref<3x1x128xf32, #tpu.memory_space<vmem>>, vector<1x1x128xf32>
    %12 = vector.shape_cast %11 : vector<1x1x128xf32> to vector<1x128xf32>
    %13 = vector.broadcast %12 : vector<1x128xf32> to vector<8x128xf32>
    %14 = arith.addf %10, %13 : vector<8x128xf32>
    %15 = math.tanh %14 : vector<8x128xf32>
    %c1_12 = arith.constant 1 : index
    %c0_13 = arith.constant 0 : index
    %c0_14 = arith.constant 0 : index
    %16 = vector.load %arg3[%c1_12, %c0_13, %c0_14] : memref<2x128x128xf32, #tpu.memory_space<vmem>>, vector<1x128x128xf32>
    %17 = vector.shape_cast %16 : vector<1x128x128xf32> to vector<128x128xf32>
    %cst_15 = arith.constant dense<0.000000e+00> : vector<8x128xf32>
    %18 = tpu.matmul %15, %17, %cst_15 {dimension_numbers = #tpu.dot_dimension_numbers<[1], [0], [0], [1], [0, 0, 1, 1], [], []>} : vector<8x128xf32>, vector<128x128xf32>, vector<8x128xf32> -> vector<8x128xf32>
    %c2 = arith.constant 2 : index
    %c0_16 = arith.constant 0 : index
    %c0_17 = arith.constant 0 : index
    %19 = vector.load %arg4[%c2, %c0_16, %c0_17] : memref<3x1x128xf32, #tpu.memory_space<vmem>>, vector<1x1x128xf32>
    %20 = vector.shape_cast %19 : vector<1x1x128xf32> to vector<1x128xf32>
    %21 = vector.broadcast %20 : vector<1x128xf32> to vector<8x128xf32>
    %22 = arith.addf %18, %21 : vector<8x128xf32>
    %23 = math.tanh %22 : vector<8x128xf32>
    %c0_18 = arith.constant 0 : index
    %c0_19 = arith.constant 0 : index
    %24 = vector.load %arg5[%c0_18, %c0_19] : memref<128x4xf32, #tpu.memory_space<vmem>>, vector<128x4xf32>
    %cst_20 = arith.constant dense<0.000000e+00> : vector<8x4xf32>
    %25 = tpu.matmul %23, %24, %cst_20 {dimension_numbers = #tpu.dot_dimension_numbers<[1], [0], [0], [1], [0, 0, 1, 1], [], []>} : vector<8x128xf32>, vector<128x4xf32>, vector<8x4xf32> -> vector<8x4xf32>
    %c0_21 = arith.constant 0 : index
    %c0_22 = arith.constant 0 : index
    %26 = vector.load %arg6[%c0_21, %c0_22] : memref<1x4xf32, #tpu.memory_space<vmem>>, vector<1x4xf32>
    %27 = vector.broadcast %26 : vector<1x4xf32> to vector<8x4xf32>
    %28 = arith.addf %25, %27 : vector<8x4xf32>
    %c0_23 = arith.constant 0 : index
    %c0_24 = arith.constant 0 : index
    %29 = vector.load %arg7[%c0_23, %c0_24] : memref<8x4xf32, #tpu.memory_space<vmem>>, vector<8x4xf32>
    tpu.vector_store %arg7[%c0_23, %c0_24], %28 {strides = array<i32>} : memref<8x4xf32, #tpu.memory_space<vmem>>, vector<8x4xf32>,
    return
  }
  func.func @transform_0(%arg0: i32) -> (i32, i32) {
    %c0_i32 = arith.constant 0 : i32
    %c0_i32_0 = arith.constant 0 : i32
    return %arg0, %c0_i32 : i32, i32
  }
  func.func @transform_1(%arg0: i32) -> (i32, i32) {
    %c0_i32 = arith.constant 0 : i32
    %c0_i32_0 = arith.constant 0 : i32
    %c0_i32_1 = arith.constant 0 : i32
    return %c0_i32, %c0_i32_0 : i32, i32
  }
  func.func @transform_2(%arg0: i32) -> (i32, i32, i32) {
    %c0_i32 = arith.constant 0 : i32
    %c0_i32_0 = arith.constant 0 : i32
    %c0_i32_1 = arith.constant 0 : i32
    %c0_i32_2 = arith.constant 0 : i32
    return %c0_i32, %c0_i32_0, %c0_i32_1 : i32, i32, i32
  }
  func.func @transform_3(%arg0: i32) -> (i32, i32, i32) {
    %c0_i32 = arith.constant 0 : i32
    %c0_i32_0 = arith.constant 0 : i32
    %c0_i32_1 = arith.constant 0 : i32
    %c0_i32_2 = arith.constant 0 : i32
    return %c0_i32, %c0_i32_0, %c0_i32_1 : i32, i32, i32
  }
  func.func @transform_4(%arg0: i32) -> (i32, i32) {
    %c0_i32 = arith.constant 0 : i32
    %c0_i32_0 = arith.constant 0 : i32
    %c0_i32_1 = arith.constant 0 : i32
    return %c0_i32, %c0_i32_0 : i32, i32
  }
  func.func @transform_5(%arg0: i32) -> (i32, i32) {
    %c0_i32 = arith.constant 0 : i32
    %c0_i32_0 = arith.constant 0 : i32
    %c0_i32_1 = arith.constant 0 : i32
    return %c0_i32, %c0_i32_0 : i32, i32
  }
  func.func @transform_6(%arg0: i32) -> (i32, i32) {
    %c0_i32 = arith.constant 0 : i32
    %c0_i32_0 = arith.constant 0 : i32
    return %arg0, %c0_i32 : i32, i32
  }
}

</mosaic_0001>

<llo_original>
// kernel: tpu_custom_call.1
$region0: #{tpu_custom_call.1}
  #allocation0 [shape = 'u32[]', space=smem, size = 0x4, offset = 0x4, fixed_abs, tag = 'smem constant byte address 0x4 - core index']
  #allocation1 [shape = 'u32[72,128]{1,0:T(1,128)}', space=vmem, size = 0x9000, scoped, tag = 'internal scratch']
  %s0 = inlined_call_operand.vmem [shape: f32[8,4], index: 0, kind: input, shape index: {}]
  %s1 = inlined_call_operand.vmem [shape: f32[4,128], index: 1, kind: input, shape index: {}]
  %s2 = inlined_call_operand.hbm [shape: f32[2,128,128], index: 2, kind: input, shape index: {}]
  %s3 = inlined_call_operand.vmem [shape: f32[3,1,128], index: 3, kind: input, shape index: {}]
  %s4 = inlined_call_operand.vmem [shape: f32[128,4], index: 4, kind: input, shape index: {}]
  %s5 = inlined_call_operand.vmem [shape: f32[1,4], index: 5, kind: input, shape index: {}]
  %s6 = inlined_call_operand.vmem [shape: f32[8,4], index: 6, kind: output, shape index: {}]
  %s7 = sld [smem:[#allocation0]]
  $region38: #{tpu_custom_call.1} parent=0
    _
  %s9 = ssub.s32 1, %s7
  %s10 = scalar_select 0, %s9, %s7
  $region1: #{tpu_custom_call.1} parent=0
    #allocation2 [shape = 'u8[131072]{0}', space=vmem, size = 0x20000, scoped, tag = 'input window, operand 2, single buffered']
    #allocation3 [shape = 's32[1]{0}', space=sflag, size = 0x4, scoped, tag = 'scoped memory for tpu_custom_call.1']
    %11 = vsyncpa [#allocation3], 0
    // Predicated region
    $region2: #{tpu_custom_call.1} parent=1 // pred_check
      _
    $region3: #{tpu_custom_call.1} parent=1 // pred_check_branch
      %13 = sbr.rel (0) target = $region5
    $region4: #{tpu_custom_call.1} parent=1 // pred_region
      _
    $region5: #{tpu_custom_call.1} parent=1 // pred_fallthru
      _
    // Predicated region
    $region6: #{tpu_custom_call.1} parent=1 // pred_check
      _
    $region7: #{tpu_custom_call.1} parent=1 // pred_check_branch
      %15 = sbr.rel (0) target = $region9
    $region8: #{tpu_custom_call.1} parent=1 // pred_region
      _
    $region9: #{tpu_custom_call.1} parent=1 // pred_fallthru
      _
    // Predicated region
    $region10: #{tpu_custom_call.1} parent=1 // pred_check
      _
    $region11: #{tpu_custom_call.1} parent=1 // pred_check_branch
      %17 = sbr.rel (0) target = $region13
    $region12: #{tpu_custom_call.1} parent=1 // pred_region
      %19 = vsyncadd [#allocation3], 0
      %s20 = sshll.u32 %s2, 4
      %s21 = int_to_ptr.hbm [resolvable:$true] %s20
      %s22 = sshll.u32 [#allocation2], 4
      %s23 = int_to_ptr.vmem [resolvable:$true] %s22
      %28 = dma.hbm_to_vmem [thread:$0]  %s21, 4096, %s23, [#allocation3], 128, 128, 8
    $region13: #{tpu_custom_call.1} parent=1 // pred_fallthru
      _
    // Predicated region
    $region14: #{tpu_custom_call.1} parent=1 // pred_check
      _
    $region15: #{tpu_custom_call.1} parent=1 // pred_check_branch
      %30 = sbr.rel (0) target = $region17
    $region16: #{tpu_custom_call.1} parent=1 // pred_region
      _
    $region17: #{tpu_custom_call.1} parent=1 // pred_fallthru
      _
    // Predicated region
    $region18: #{tpu_custom_call.1} parent=1 // pred_check
      _
    $region19: #{tpu_custom_call.1} parent=1 // pred_check_branch
      %32 = sbr.rel (0) target = $region21
    $region20: #{tpu_custom_call.1} parent=1 // pred_region
      _
    $region21: #{tpu_custom_call.1} parent=1 // pred_fallthru
      _
    // Predicated region
    $region22: #{tpu_custom_call.1} parent=1 // pred_check
      _
    $region23: #{tpu_custom_call.1} parent=1 // pred_check_branch
      %34 = sbr.rel (0) target = $region25
    $region24: #{tpu_custom_call.1} parent=1 // pred_region
      _
    $region25: #{tpu_custom_call.1} parent=1 // pred_fallthru
      _
    // Predicated region
    $region26: #{tpu_custom_call.1} parent=1 // pred_check
      _
    $region27: #{tpu_custom_call.1} parent=1 // pred_check_branch
      %36 = sbr.rel (0) target = $region29
    $region28: #{tpu_custom_call.1} parent=1 // pred_region
      %38 = dma.done [#allocation3], 4096
    $region29: #{tpu_custom_call.1} parent=1 // pred_fallthru
      _
    %v39 = vld [vmem:[%s0] sm:$0xff]
    %v40 = vld [vmem:[%s1] sm:$0xf]
    %v41 = vld [vmem:[%s3] sm:$0x1]
    %v43 = vperm.slane %v41, 0
    %vm45 = vcmask 31744
    %v47 = vsel %vm45, %v39, 0
    %vm49 = vcmask 1043456
    %v51 = vsel %vm49, %v40, 0
    %53 = vmatpush.msra.mxu0 0.0
    %54 = vmatpush.msra.mxu0 0.0
    %55 = vmatpush.msra.mxu0 0.0
    %56 = vmatpush.msra.mxu0 0.0
    %57 = vmatpush.msra.mxu0 0.0
    %58 = vmatpush.msra.mxu0 0.0
    %59 = vmatpush.msra.mxu0 0.0
    %60 = vmatpush.msra.mxu0 0.0
    %61 = vmatpush.msra.mxu0 0.0
    %62 = vmatpush.msra.mxu0 0.0
    %63 = vmatpush.msra.mxu0 0.0
    %64 = vmatpush.msra.mxu0 0.0
    %65 = vmatpush.msra.mxu0 0.0
    %66 = vmatpush.msra.mxu0 0.0
    %67 = vmatpush.msra.mxu0 0.0
    %68 = vmatpush.msra.mxu0 %v51
    %69 = vmatmul.f32.gmra.mxu0 %v47
    %v70 = vpop.f32.mrf.mxu0
    %v71 = vadd.f32 %v43, %v70
    %72 = vdwg.mxu0
    %v73 = vtanh.pop %v71
    %v74 = vld [vmem:[#allocation2] sm:$0xff]
    %v75 = vld [vmem:[#allocation2 + $0x8] sm:$0xff]
    %v76 = vld [vmem:[#allocation2 + $0x10] sm:$0xff]
    %v77 = vld [vmem:[#allocation2 + $0x18] sm:$0xff]
    %v78 = vld [vmem:[#allocation2 + $0x20] sm:$0xff]
    %v79 = vld [vmem:[#allocation2 + $0x28] sm:$0xff]
    %v80 = vld [vmem:[#allocation2 + $0x30] sm:$0xff]
    %v81 = vld [vmem:[#allocation2 + $0x38] sm:$0xff]
    %v82 = vld [vmem:[#allocation2 + $0x40] sm:$0xff]
    %v83 = vld [vmem:[#allocation2 + $0x48] sm:$0xff]
    %v84 = vld [vmem:[#allocation2 + $0x50] sm:$0xff]
    %v85 = vld [vmem:[#allocation2 + $0x58] sm:$0xff]
    %v86 = vld [vmem:[#allocation2 + $0x60] sm:$0xff]
    %v87 = vld [vmem:[#allocation2 + $0x68] sm:$0xff]
    %v88 = vld [vmem:[#allocation2 + $0x70] sm:$0xff]
    %v89 = vld [vmem:[#allocation2 + $0x78] sm:$0xff]
    %s90 = scalar_lea.vmem %s3, 1
    %v91 = vld [vmem:[%s90] sm:$0x1]
    %v93 = vperm.slane %v91, 0
    %95 = vmatpush.msra.mxu0 %v89
    %96 = vmatpush.msra.mxu0 %v88
    %97 = vmatpush.msra.mxu0 %v87
    %98 = vmatpush.msra.mxu0 %v86
    %99 = vmatpush.msra.mxu0 %v85
    %100 = vmatpush.msra.mxu0 %v84
    %101 = vmatpush.msra.mxu0 %v83
    %102 = vmatpush.msra.mxu0 %v82
    %103 = vmatpush.msra.mxu0 %v81
    %104 = vmatpush.msra.mxu0 %v80
    %105 = vmatpush.msra.mxu0 %v79
    %106 = vmatpush.msra.mxu0 %v78
    %107 = vmatpush.msra.mxu0 %v77
    %108 = vmatpush.msra.mxu0 %v76
    %109 = vmatpush.msra.mxu0 %v75
    %110 = vmatpush.msra.mxu0 %v74
    %111 = vmatmul.f32.gmra.mxu0 %v73
    %v112 = vpop.f32.mrf.mxu0
    %v113 = vadd.f32 %v93, %v112
    %114 = vdwg.mxu0
    %v115 = vtanh.pop %v113
    %s116 = scalar_lea.vmem [#allocation2], 128
    %v117 = vld [vmem:[%s116] sm:$0xff]
    %v118 = vld [vmem:[%s116 + $0x8] sm:$0xff]
    %v119 = vld [vmem:[%s116 + $0x10] sm:$0xff]
    %v120 = vld [vmem:[%s116 + $0x18] sm:$0xff]
    %v121 = vld [vmem:[%s116 + $0x20] sm:$0xff]
    %v122 = vld [vmem:[%s116 + $0x28] sm:$0xff]
    %v123 = vld [vmem:[%s116 + $0x30] sm:$0xff]
    %v124 = vld [vmem:[%s116 + $0x38] sm:$0xff]
    %v125 = vld [vmem:[%s116 + $0x40] sm:$0xff]
    %v126 = vld [vmem:[%s116 + $0x48] sm:$0xff]
    %v127 = vld [vmem:[%s116 + $0x50] sm:$0xff]
    %v128 = vld [vmem:[%s116 + $0x58] sm:$0xff]
    %v129 = vld [vmem:[%s116 + $0x60] sm:$0xff]
    %v130 = vld [vmem:[%s116 + $0x68] sm:$0xff]
    %v131 = vld [vmem:[%s116 + $0x70] sm:$0xff]
    %v132 = vld [vmem:[%s116 + $0x78] sm:$0xff]
    %s133 = scalar_lea.vmem %s3, 2
    %v134 = vld [vmem:[%s133] sm:$0x1]
    %v136 = vperm.slane %v134, 0
    %138 = vmatpush.msra.mxu0 %v132
    %139 = vmatpush.msra.mxu0 %v131
    %140 = vmatpush.msra.mxu0 %v130
    %141 = vmatpush.msra.mxu0 %v129
    %142 = vmatpush.msra.mxu0 %v128
    %143 = vmatpush.msra.mxu0 %v127
    %144 = vmatpush.msra.mxu0 %v126
    %145 = vmatpush.msra.mxu0 %v125
    %146 = vmatpush.msra.mxu0 %v124
    %147 = vmatpush.msra.mxu0 %v123
    %148 = vmatpush.msra.mxu0 %v122
    %149 = vmatpush.msra.mxu0 %v121
    %150 = vmatpush.msra.mxu0 %v120
    %151 = vmatpush.msra.mxu0 %v119
    %152 = vmatpush.msra.mxu0 %v118
    %153 = vmatpush.msra.mxu0 %v117
    %154 = vmatmul.f32.gmra.mxu0 %v115
    %v155 = vpop.f32.mrf.mxu0
    %v156 = vadd.f32 %v136, %v155
    %157 = vdwg.mxu0
    %v158 = vtanh.pop %v156
    %v159 = vld [vmem:[%s4] sm:$0xff]
    %v160 = vld [vmem:[%s4 + $0x8] sm:$0xff]
    %v161 = vld [vmem:[%s4 + $0x10] sm:$0xff]
    %v162 = vld [vmem:[%s4 + $0x18] sm:$0xff]
    %v163 = vld [vmem:[%s4 + $0x20] sm:$0xff]
    %v164 = vld [vmem:[%s4 + $0x28] sm:$0xff]
    %v165 = vld [vmem:[%s4 + $0x30] sm:$0xff]
    %v166 = vld [vmem:[%s4 + $0x38] sm:$0xff]
    %v167 = vld [vmem:[%s4 + $0x40] sm:$0xff]
    %v168 = vld [vmem:[%s4 + $0x48] sm:$0xff]
    %v169 = vld [vmem:[%s4 + $0x50] sm:$0xff]
    %v170 = vld [vmem:[%s4 + $0x58] sm:$0xff]
    %v171 = vld [vmem:[%s4 + $0x60] sm:$0xff]
    %v172 = vld [vmem:[%s4 + $0x68] sm:$0xff]
    %v173 = vld [vmem:[%s4 + $0x70] sm:$0xff]
    %v174 = vld [vmem:[%s4 + $0x78] sm:$0xff]
    %v175 = vld [vmem:[%s5] sm:$0x1]
    %v177 = vperm.slane %v175, 0
    %179 = vmatpush.msra.mxu0 %v174
    %180 = vmatpush.msra.mxu0 %v173
    %181 = vmatpush.msra.mxu0 %v172
    %182 = vmatpush.msra.mxu0 %v171
    %183 = vmatpush.msra.mxu0 %v170
    %184 = vmatpush.msra.mxu0 %v169
    %185 = vmatpush.msra.mxu0 %v168
    %186 = vmatpush.msra.mxu0 %v167
    %187 = vmatpush.msra.mxu0 %v166
    %188 = vmatpush.msra.mxu0 %v165
    %189 = vmatpush.msra.mxu0 %v164
    %190 = vmatpush.msra.mxu0 %v163
    %191 = vmatpush.msra.mxu0 %v162
    %192 = vmatpush.msra.mxu0 %v161
    %193 = vmatpush.msra.mxu0 %v160
    %194 = vmatpush.msra.mxu0 %v159
    %195 = vmatmul.f32.gmra.mxu0 %v158
    %v196 = vpop.f32.mrf.mxu0
    %v197 = vadd.f32 %v177, %v196
    %198 = vdwg.mxu0
    %199 = vst.msk [vmem:[%s6] sm:$0xff] %vm45, %v197
    // Predicated region
    $region30: #{tpu_custom_call.1} parent=1 // pred_check
      _
    $region31: #{tpu_custom_call.1} parent=1 // pred_check_branch
      %201 = sbr.rel (0) target = $region33
    $region32: #{tpu_custom_call.1} parent=1 // pred_region
      _
    $region33: #{tpu_custom_call.1} parent=1 // pred_fallthru
      _
    // Predicated region
    $region34: #{tpu_custom_call.1} parent=1 // pred_check
      _
    $region35: #{tpu_custom_call.1} parent=1 // pred_check_branch
      %203 = sbr.rel (0) target = $region37
    $region36: #{tpu_custom_call.1} parent=1 // pred_region
      _
    $region37: #{tpu_custom_call.1} parent=1 // pred_fallthru
      _
    %204 = vsyncpa [#allocation3], 1

</llo_original>
